<compile_context>
chip_gen: v5e
topology: v5e:2x2
jax: 0.10.0
libtpu: 0.0.40
codegen_flags: <defaults>
</compile_context>

<pallas_src>
import jax
import jax.numpy as jnp
import numpy as np
from jax.experimental import pallas as pl
from jax.experimental.pallas import tpu as pltpu

MAX_DIFFUSION_STEP = 2                                   # K
NUM_SUPPORTS = 2                                         # dual_random_walk
NUM_MATRICES = NUM_SUPPORTS * MAX_DIFFUSION_STEP + 1     # 5


# ------------------------------- kernel ------------------------------------

def _dcgru_seq_kernel(x_ref, h0_ref, s1_ref, s2_ref,
                      w_ru_ref, w_c_ref, b_ru_ref, b_c_ref,
                      out_ref, h_scratch):
    """One DCGRU step per grid point (b, t); h carried in VMEM scratch."""
    t = pl.program_id(1)

    @pl.when(t == 0)
    def _():
        h_scratch[...] = h0_ref[...]          # load this batch element's h0

    x = x_ref[...]            # (N, Din)
    h = h_scratch[...]        # (N, H)
    s1 = s1_ref[...]          # (N, N)
    s2 = s2_ref[...]          # (N, N)
    hd = h.shape[-1]

    def diffuse_stack(v):
        # [v, T1(S1)v, T2(S1)v, T1(S2)v, T2(S2)v] lane-stacked to
        # (N, NUM_MATRICES * W) — same ordering as the torch module's
        # support_set / supports_concat.
        terms = [v]
        for s in (s1, s2):
            v0 = v
            v1 = jnp.dot(s, v0, preferred_element_type=jnp.float32)
            terms.append(v1)
            for _ in range(2, MAX_DIFFUSION_STEP + 1):
                v2 = 2.0 * jnp.dot(s, v1, preferred_element_type=jnp.float32) - v0
                terms.append(v2)
                v1, v0 = v2, v1
        return jnp.concatenate(terms, axis=-1)

    # Joint [x | h] diffusion: one Chebyshev pass instead of two.
    sc = diffuse_stack(jnp.concatenate([x, h], axis=-1))     # (N, 5*(Din+H))

    # Fused r/u gate: single deep dot (K = 5*(Din+H), 2H output lanes).
    pre_ru = jnp.dot(sc, w_ru_ref[...],
                     preferred_element_type=jnp.float32) + b_ru_ref[...]
    ru = jax.nn.sigmoid(pre_ru)
    r = ru[:, :hd]
    u = ru[:, hd:]

    # Candidate state: joint [x | r*h] diffusion (same MXU cost as diffusing
    # r*h alone at <=128 lanes) feeding one deep dot with the original w_c.
    scr = diffuse_stack(jnp.concatenate([x, r * h], axis=-1))
    pre_c = jnp.dot(scr, w_c_ref[...],
                    preferred_element_type=jnp.float32) + b_c_ref[...]
    c = jnp.tanh(pre_c)

    h_new = u * h + (1.0 - u) * c
    h_scratch[...] = h_new                    # carry to next timestep
    out_ref[...] = h_new


# ------------------------------ wrappers ------------------------------------

def dcgru_sequence(inputs_seq, h0, support1, support2,
                   w_r, w_u, w_c, b_r, b_u, b_c):
    """DCGRUCell rolled over a (batch, time) grid inside one pallas_call.

    inputs_seq : (B, T, N, Din)   h0 : (B, N, H)
    returns    : (B, T, N, H) hidden state after every timestep.
    """
    batch, seq_len, num_nodes, input_dim = inputs_seq.shape
    hidden_dim = h0.shape[-1]

    # Host-side (one-time) fusions: r/u gate weights column-concatenated,
    # biases reshaped to broadcastable rows.  w_c keeps the torch row layout
    # because the kernel consumes the lane-stacked diffusion terms directly.
    w_ru = jnp.concatenate([w_r, w_u], axis=-1)              # (5*(Din+H), 2H)
    b_ru = jnp.concatenate([jnp.reshape(b_r, (1, -1)),
                            jnp.reshape(b_u, (1, -1))], axis=-1)   # (1, 2H)
    b_c2 = jnp.reshape(b_c, (1, -1))                                # (1, H)

    const2 = lambda b, t: (0, 0)   # VMEM-resident operands (no re-DMA)

    return pl.pallas_call(
        _dcgru_seq_kernel,
        out_shape=jax.ShapeDtypeStruct(
            (batch, seq_len, num_nodes, hidden_dim), jnp.float32),
        grid=(batch, seq_len),
        in_specs=[
            pl.BlockSpec((None, None, num_nodes, input_dim),
                         lambda b, t: (b, t, 0, 0)),
            pl.BlockSpec((None, num_nodes, hidden_dim),
                         lambda b, t: (b, 0, 0)),
            pl.BlockSpec((num_nodes, num_nodes), const2),
            pl.BlockSpec((num_nodes, num_nodes), const2),
            pl.BlockSpec(w_ru.shape, const2),
            pl.BlockSpec(w_c.shape, const2),
            pl.BlockSpec(b_ru.shape, const2),
            pl.BlockSpec(b_c2.shape, const2),
        ],
        out_specs=pl.BlockSpec((None, None, num_nodes, hidden_dim),
                               lambda b, t: (b, t, 0, 0)),
        scratch_shapes=[pltpu.VMEM((num_nodes, hidden_dim), jnp.float32)],
        compiler_params=pltpu.CompilerParams(
            dimension_semantics=("parallel", "arbitrary")),
    )(inputs_seq, h0, support1, support2, w_ru, w_c, b_ru, b_c2)


def dcgru_cell(inputs, hx, support1, support2, w_r, w_u, w_c, b_r, b_u, b_c):
    """Single-step forward matching the PyTorch module: (N,Din),(N,H)->(N,H)."""
    out = dcgru_sequence(inputs[None, None], hx[None], support1, support2,
                         w_r, w_u, w_c, b_r, b_u, b_c)
    return out[0, 0]


# ----------------------------- glue / setup --------------------------------

def random_walk_matrix(adj):
    """D^-1 A (row-normalized), matching calculate_random_walk_matrix."""
    d = adj.sum(axis=1)
    d_inv = jnp.where(d > 0, 1.0 / d, 0.0)
    return d_inv[:, None] * adj


def xavier_uniform(key, shape):
    fan_in, fan_out = shape
    bound = float(np.sqrt(6.0 / (fan_in + fan_out)))
    return jax.random.uniform(key, shape, jnp.float32, -bound, bound)


def reference_dcgru_step(inputs, hx, s1, s2, w_r, w_u, w_c, b_r, b_u, b_c):
    """Direct transcription of the PyTorch forward (concat formulation)."""
    def diffuse(xc):
        outs = [xc]
        for s in (s1, s2):
            x0 = xc
            x1 = s @ x0
            outs.append(x1)
            for _ in range(2, MAX_DIFFUSION_STEP + 1):
                x2 = 2.0 * (s @ x1) - x0
                outs.append(x2)
                x1, x0 = x2, x1
        return jnp.concatenate(outs, axis=-1)

    sc = diffuse(jnp.concatenate([inputs, hx], axis=-1))
    r = jax.nn.sigmoid(sc @ w_r + b_r)
    u = jax.nn.sigmoid(sc @ w_u + b_u)
    scr = diffuse(jnp.concatenate([inputs, r * hx], axis=-1))
    c = jnp.tanh(scr @ w_c + b_c)
    return u * hx + (1.0 - u) * c


if __name__ == "__main__":
    batch = 2
    seq_len = 8
    num_nodes = 16
    input_dim = 4
    hidden_dim = 32
    input_size = input_dim + hidden_dim

    key = jax.random.PRNGKey(0)
    (k_adj, k_x, k_h, k_wr, k_wu, k_wc,
     k_br, k_bu, k_bc) = jax.random.split(key, 9)

    # deterministic synthetic adjacency (non-negative)
    adj = jax.random.uniform(k_adj, (num_nodes, num_nodes), jnp.float32)
    adj = jnp.where(adj > 0.5, adj, 0.0)

    # supports exactly as in the module: RW(A).T and RW(A.T).T
    support1 = random_walk_matrix(adj).T
    support2 = random_walk_matrix(adj.T).T

    inputs_seq = jax.random.normal(
        k_x, (batch, seq_len, num_nodes, input_dim), jnp.float32)
    h0 = jax.random.normal(k_h, (batch, num_nodes, hidden_dim), jnp.float32)

    w_shape = (input_size * NUM_MATRICES, hidden_dim)
    w_r = xavier_uniform(k_wr, w_shape)
    w_u = xavier_uniform(k_wu, w_shape)
    w_c = xavier_uniform(k_wc, w_shape)
    b_r = 0.1 * jax.random.normal(k_br, (hidden_dim,), jnp.float32)
    b_u = 0.1 * jax.random.normal(k_bu, (hidden_dim,), jnp.float32)
    b_c = 0.1 * jax.random.normal(k_bc, (hidden_dim,), jnp.float32)

    # --- fused (batch, time) kernel run ---
    out = dcgru_sequence(inputs_seq, h0, support1, support2,
                         w_r, w_u, w_c, b_r, b_u, b_c)
    out = jax.block_until_ready(out)

    # --- reference: per-step transcription of the torch forward ---
    ref_batches = []
    for b in range(batch):
        h = h0[b]
        states = []
        for t in range(seq_len):
            h = reference_dcgru_step(inputs_seq[b, t], h, support1, support2,
                                     w_r, w_u, w_c, b_r, b_u, b_c)
            states.append(h)
        ref_batches.append(jnp.stack(states))
    ref = jnp.stack(ref_batches)

    np.testing.assert_allclose(np.asarray(out), np.asarray(ref),
                               rtol=1e-4, atol=1e-4)

    # --- single-step module-forward interface check ---
    cell_out = jax.block_until_ready(
        dcgru_cell(inputs_seq[0, 0], h0[0], support1, support2,
                   w_r, w_u, w_c, b_r, b_u, b_c))
    cell_ref = reference_dcgru_step(inputs_seq[0, 0], h0[0], support1,
                                    support2, w_r, w_u, w_c, b_r, b_u, b_c)
    np.testing.assert_allclose(np.asarray(cell_out), np.asarray(cell_ref),
                               rtol=1e-4, atol=1e-4)

    print("KERNEL_OK")
</pallas_src>

<mosaic_0001>
module attributes {stable_mosaic.version = 11 : i64} {
  func.func @_dcgru_seq_kernel(%arg0: i32, %arg1: i32, %arg2: memref<1x1x16x4xf32, #tpu.memory_space<vmem>>, %arg3: memref<1x16x32xf32, #tpu.memory_space<vmem>>, %arg4: memref<16x16xf32, #tpu.memory_space<vmem>>, %arg5: memref<16x16xf32, #tpu.memory_space<vmem>>, %arg6: memref<180x64xf32, #tpu.memory_space<vmem>>, %arg7: memref<180x32xf32, #tpu.memory_space<vmem>>, %arg8: memref<1x64xf32, #tpu.memory_space<vmem>>, %arg9: memref<1x32xf32, #tpu.memory_space<vmem>>, %arg10: memref<1x1x16x32xf32, #tpu.memory_space<vmem>>, %arg11: memref<16x32xf32, #tpu.memory_space<vmem>>) attributes {dimension_semantics = [#tpu.dimension_semantics<parallel>, #tpu.dimension_semantics<arbitrary>], iteration_bounds = array<i64: 2, 8>, scalar_prefetch = 0 : i64, scratch_operands = 1 : i64, tpu.core_type = #tpu.core_type<tc>, window_params = [{transform_indices = @transform_0, window_bounds = array<i64: 1, 1, 16, 4>}, {transform_indices = @transform_1, window_bounds = array<i64: 1, 16, 32>}, {pipeline_mode = #tpu.pipeline_mode<synchronous>, transform_indices = @transform_2, window_bounds = array<i64: 16, 16>}, {pipeline_mode = #tpu.pipeline_mode<synchronous>, transform_indices = @transform_3, window_bounds = array<i64: 16, 16>}, {pipeline_mode = #tpu.pipeline_mode<synchronous>, transform_indices = @transform_4, window_bounds = array<i64: 180, 64>}, {pipeline_mode = #tpu.pipeline_mode<synchronous>, transform_indices = @transform_5, window_bounds = array<i64: 180, 32>}, {pipeline_mode = #tpu.pipeline_mode<synchronous>, transform_indices = @transform_6, window_bounds = array<i64: 1, 64>}, {pipeline_mode = #tpu.pipeline_mode<synchronous>, transform_indices = @transform_7, window_bounds = array<i64: 1, 32>}, {transform_indices = @transform_8, window_bounds = array<i64: 1, 1, 16, 32>}]} {
    %c0_i32 = arith.constant 0 : i32
    %0 = arith.cmpi eq, %arg1, %c0_i32 : i32
    %1 = arith.extui %0 : i1 to i32
    %c0_i32_0 = arith.constant 0 : i32
    %2 = arith.cmpi ne, %1, %c0_i32_0 : i32
    scf.if %2 {
      %c0_39 = arith.constant 0 : index
      %c0_40 = arith.constant 0 : index
      %c0_41 = arith.constant 0 : index
      %60 = vector.load %arg3[%c0_39, %c0_40, %c0_41] : memref<1x16x32xf32, #tpu.memory_space<vmem>>, vector<1x16x32xf32>
      %61 = vector.shape_cast %60 : vector<1x16x32xf32> to vector<16x32xf32>
      %c0_42 = arith.constant 0 : index
      %c0_43 = arith.constant 0 : index
      %62 = vector.load %arg11[%c0_42, %c0_43] : memref<16x32xf32, #tpu.memory_space<vmem>>, vector<16x32xf32>
      tpu.vector_store %arg11[%c0_42, %c0_43], %61 {strides = array<i32>} : memref<16x32xf32, #tpu.memory_space<vmem>>, vector<16x32xf32>,
    } else {
    }
    %c0 = arith.constant 0 : index
    %c0_1 = arith.constant 0 : index
    %c0_2 = arith.constant 0 : index
    %c0_3 = arith.constant 0 : index
    %3 = vector.load %arg2[%c0, %c0_1, %c0_2, %c0_3] : memref<1x1x16x4xf32, #tpu.memory_space<vmem>>, vector<1x1x16x4xf32>
    %4 = vector.shape_cast %3 : vector<1x1x16x4xf32> to vector<16x4xf32>
    %c0_4 = arith.constant 0 : index
    %c0_5 = arith.constant 0 : index
    %5 = vector.load %arg11[%c0_4, %c0_5] : memref<16x32xf32, #tpu.memory_space<vmem>>, vector<16x32xf32>
    %c0_6 = arith.constant 0 : index
    %c0_7 = arith.constant 0 : index
    %6 = vector.load %arg4[%c0_6, %c0_7] : memref<16x16xf32, #tpu.memory_space<vmem>>, vector<16x16xf32>
    %c0_8 = arith.constant 0 : index
    %c0_9 = arith.constant 0 : index
    %7 = vector.load %arg5[%c0_8, %c0_9] : memref<16x16xf32, #tpu.memory_space<vmem>>, vector<16x16xf32>
    %8 = tpu.concatenate %4, %5 in 1 : vector<16x4xf32>, vector<16x32xf32> -> vector<16x36xf32>
    %cst = arith.constant dense<0.000000e+00> : vector<16x36xf32>
    %9 = tpu.matmul %6, %8, %cst {dimension_numbers = #tpu.dot_dimension_numbers<[1], [0], [0], [1], [0, 0, 1, 1], [], []>} : vector<16x16xf32>, vector<16x36xf32>, vector<16x36xf32> -> vector<16x36xf32>
    %cst_10 = arith.constant dense<0.000000e+00> : vector<16x36xf32>
    %10 = tpu.matmul %6, %9, %cst_10 {dimension_numbers = #tpu.dot_dimension_numbers<[1], [0], [0], [1], [0, 0, 1, 1], [], []>} : vector<16x16xf32>, vector<16x36xf32>, vector<16x36xf32> -> vector<16x36xf32>
    %cst_11 = arith.constant 2.000000e+00 : f32
    %11 = vector.broadcast %cst_11 : f32 to vector<16x36xf32>
    %12 = arith.mulf %11, %10 : vector<16x36xf32>
    %13 = arith.subf %12, %8 : vector<16x36xf32>
    %cst_12 = arith.constant dense<0.000000e+00> : vector<16x36xf32>
    %14 = tpu.matmul %7, %8, %cst_12 {dimension_numbers = #tpu.dot_dimension_numbers<[1], [0], [0], [1], [0, 0, 1, 1], [], []>} : vector<16x16xf32>, vector<16x36xf32>, vector<16x36xf32> -> vector<16x36xf32>
    %cst_13 = arith.constant dense<0.000000e+00> : vector<16x36xf32>
    %15 = tpu.matmul %7, %14, %cst_13 {dimension_numbers = #tpu.dot_dimension_numbers<[1], [0], [0], [1], [0, 0, 1, 1], [], []>} : vector<16x16xf32>, vector<16x36xf32>, vector<16x36xf32> -> vector<16x36xf32>
    %cst_14 = arith.constant 2.000000e+00 : f32
    %16 = vector.broadcast %cst_14 : f32 to vector<16x36xf32>
    %17 = arith.mulf %16, %15 : vector<16x36xf32>
    %18 = arith.subf %17, %8 : vector<16x36xf32>
    %19 = tpu.concatenate %8, %9, %13, %14, %18 in 1 : vector<16x36xf32>, vector<16x36xf32>, vector<16x36xf32>, vector<16x36xf32>, vector<16x36xf32> -> vector<16x180xf32>
    %c0_15 = arith.constant 0 : index
    %c0_16 = arith.constant 0 : index
    %20 = vector.load %arg6[%c0_15, %c0_16] : memref<180x64xf32, #tpu.memory_space<vmem>>, vector<180x64xf32>
    %cst_17 = arith.constant dense<0.000000e+00> : vector<16x64xf32>
    %21 = tpu.matmul %19, %20, %cst_17 {dimension_numbers = #tpu.dot_dimension_numbers<[1], [0], [0], [1], [0, 0, 1, 1], [], []>} : vector<16x180xf32>, vector<180x64xf32>, vector<16x64xf32> -> vector<16x64xf32>
    %c0_18 = arith.constant 0 : index
    %c0_19 = arith.constant 0 : index
    %22 = vector.load %arg8[%c0_18, %c0_19] : memref<1x64xf32, #tpu.memory_space<vmem>>, vector<1x64xf32>
    %23 = vector.broadcast %22 : vector<1x64xf32> to vector<16x64xf32>
    %24 = arith.addf %21, %23 : vector<16x64xf32>
    %25 = arith.negf %24 : vector<16x64xf32>
    %26 = math.exp %25 : vector<16x64xf32>
    %cst_20 = arith.constant 1.000000e+00 : f32
    %27 = vector.broadcast %cst_20 : f32 to vector<16x64xf32>
    %28 = arith.addf %27, %26 : vector<16x64xf32>
    %29 = arith.divf %27, %28 : vector<16x64xf32>
    %30 = vector.extract_strided_slice %29 {offsets = [0, 0], sizes = [16, 32], strides = [1, 1]} : vector<16x64xf32> to vector<16x32xf32>
    %31 = vector.extract_strided_slice %29 {offsets = [0, 32], sizes = [16, 32], strides = [1, 1]} : vector<16x64xf32> to vector<16x32xf32>
    %32 = arith.mulf %30, %5 : vector<16x32xf32>
    %33 = tpu.concatenate %4, %32 in 1 : vector<16x4xf32>, vector<16x32xf32> -> vector<16x36xf32>
    %cst_21 = arith.constant dense<0.000000e+00> : vector<16x36xf32>
    %34 = tpu.matmul %6, %33, %cst_21 {dimension_numbers = #tpu.dot_dimension_numbers<[1], [0], [0], [1], [0, 0, 1, 1], [], []>} : vector<16x16xf32>, vector<16x36xf32>, vector<16x36xf32> -> vector<16x36xf32>
    %cst_22 = arith.constant dense<0.000000e+00> : vector<16x36xf32>
    %35 = tpu.matmul %6, %34, %cst_22 {dimension_numbers = #tpu.dot_dimension_numbers<[1], [0], [0], [1], [0, 0, 1, 1], [], []>} : vector<16x16xf32>, vector<16x36xf32>, vector<16x36xf32> -> vector<16x36xf32>
    %cst_23 = arith.constant 2.000000e+00 : f32
    %36 = vector.broadcast %cst_23 : f32 to vector<16x36xf32>
    %37 = arith.mulf %36, %35 : vector<16x36xf32>
    %38 = arith.subf %37, %33 : vector<16x36xf32>
    %cst_24 = arith.constant dense<0.000000e+00> : vector<16x36xf32>
    %39 = tpu.matmul %7, %33, %cst_24 {dimension_numbers = #tpu.dot_dimension_numbers<[1], [0], [0], [1], [0, 0, 1, 1], [], []>} : vector<16x16xf32>, vector<16x36xf32>, vector<16x36xf32> -> vector<16x36xf32>
    %cst_25 = arith.constant dense<0.000000e+00> : vector<16x36xf32>
    %40 = tpu.matmul %7, %39, %cst_25 {dimension_numbers = #tpu.dot_dimension_numbers<[1], [0], [0], [1], [0, 0, 1, 1], [], []>} : vector<16x16xf32>, vector<16x36xf32>, vector<16x36xf32> -> vector<16x36xf32>
    %cst_26 = arith.constant 2.000000e+00 : f32
    %41 = vector.broadcast %cst_26 : f32 to vector<16x36xf32>
    %42 = arith.mulf %41, %40 : vector<16x36xf32>
    %43 = arith.subf %42, %33 : vector<16x36xf32>
    %44 = tpu.concatenate %33, %34, %38, %39, %43 in 1 : vector<16x36xf32>, vector<16x36xf32>, vector<16x36xf32>, vector<16x36xf32>, vector<16x36xf32> -> vector<16x180xf32>
    %c0_27 = arith.constant 0 : index
    %c0_28 = arith.constant 0 : index
    %45 = vector.load %arg7[%c0_27, %c0_28] : memref<180x32xf32, #tpu.memory_space<vmem>>, vector<180x32xf32>
    %cst_29 = arith.constant dense<0.000000e+00> : vector<16x32xf32>
    %46 = tpu.matmul %44, %45, %cst_29 {dimension_numbers = #tpu.dot_dimension_numbers<[1], [0], [0], [1], [0, 0, 1, 1], [], []>} : vector<16x180xf32>, vector<180x32xf32>, vector<16x32xf32> -> vector<16x32xf32>
    %c0_30 = arith.constant 0 : index
    %c0_31 = arith.constant 0 : index
    %47 = vector.load %arg9[%c0_30, %c0_31] : memref<1x32xf32, #tpu.memory_space<vmem>>, vector<1x32xf32>
    %48 = vector.broadcast %47 : vector<1x32xf32> to vector<16x32xf32>
    %49 = arith.addf %46, %48 : vector<16x32xf32>
    %50 = math.tanh %49 : vector<16x32xf32>
    %51 = arith.mulf %31, %5 : vector<16x32xf32>
    %cst_32 = arith.constant 1.000000e+00 : f32
    %52 = vector.broadcast %cst_32 : f32 to vector<16x32xf32>
    %53 = arith.subf %52, %31 : vector<16x32xf32>
    %54 = arith.mulf %53, %50 : vector<16x32xf32>
    %55 = arith.addf %51, %54 : vector<16x32xf32>
    %c0_33 = arith.constant 0 : index
    %c0_34 = arith.constant 0 : index
    %56 = vector.load %arg11[%c0_33, %c0_34] : memref<16x32xf32, #tpu.memory_space<vmem>>, vector<16x32xf32>
    tpu.vector_store %arg11[%c0_33, %c0_34], %55 {strides = array<i32>} : memref<16x32xf32, #tpu.memory_space<vmem>>, vector<16x32xf32>,
    %c0_35 = arith.constant 0 : index
    %c0_36 = arith.constant 0 : index
    %c0_37 = arith.constant 0 : index
    %c0_38 = arith.constant 0 : index
    %57 = vector.load %arg10[%c0_35, %c0_36, %c0_37, %c0_38] : memref<1x1x16x32xf32, #tpu.memory_space<vmem>>, vector<1x1x16x32xf32>
    %58 = vector.shape_cast %57 : vector<1x1x16x32xf32> to vector<16x32xf32>
    %59 = vector.shape_cast %55 : vector<16x32xf32> to vector<1x1x16x32xf32>
    tpu.vector_store %arg10[%c0_35, %c0_36, %c0_37, %c0_38], %59 {strides = array<i32>} : memref<1x1x16x32xf32, #tpu.memory_space<vmem>>, vector<1x1x16x32xf32>,
    return
  }
  func.func @transform_0(%arg0: i32, %arg1: i32) -> (i32, i32, i32, i32) {
    %c0_i32 = arith.constant 0 : i32
    %c0_i32_0 = arith.constant 0 : i32
    %c0_i32_1 = arith.constant 0 : i32
    return %arg0, %arg1, %c0_i32, %c0_i32_0 : i32, i32, i32, i32
  }
  func.func @transform_1(%arg0: i32, %arg1: i32) -> (i32, i32, i32) {
    %c0_i32 = arith.constant 0 : i32
    %c0_i32_0 = arith.constant 0 : i32
    %c0_i32_1 = arith.constant 0 : i32
    return %arg0, %c0_i32, %c0_i32_0 : i32, i32, i32
  }
  func.func @transform_2(%arg0: i32, %arg1: i32) -> (i32, i32) {
    %c0_i32 = arith.constant 0 : i32
    %c0_i32_0 = arith.constant 0 : i32
    %c0_i32_1 = arith.constant 0 : i32
    return %c0_i32, %c0_i32_0 : i32, i32
  }
  func.func @transform_3(%arg0: i32, %arg1: i32) -> (i32, i32) {
    %c0_i32 = arith.constant 0 : i32
    %c0_i32_0 = arith.constant 0 : i32
    %c0_i32_1 = arith.constant 0 : i32
    return %c0_i32, %c0_i32_0 : i32, i32
  }
  func.func @transform_4(%arg0: i32, %arg1: i32) -> (i32, i32) {
    %c0_i32 = arith.constant 0 : i32
    %c0_i32_0 = arith.constant 0 : i32
    %c0_i32_1 = arith.constant 0 : i32
    return %c0_i32, %c0_i32_0 : i32, i32
  }
  func.func @transform_5(%arg0: i32, %arg1: i32) -> (i32, i32) {
    %c0_i32 = arith.constant 0 : i32
    %c0_i32_0 = arith.constant 0 : i32
    %c0_i32_1 = arith.constant 0 : i32
    return %c0_i32, %c0_i32_0 : i32, i32
  }
  func.func @transform_6(%arg0: i32, %arg1: i32) -> (i32, i32) {
    %c0_i32 = arith.constant 0 : i32
    %c0_i32_0 = arith.constant 0 : i32
    %c0_i32_1 = arith.constant 0 : i32
    return %c0_i32, %c0_i32_0 : i32, i32
  }
  func.func @transform_7(%arg0: i32, %arg1: i32) -> (i32, i32) {
    %c0_i32 = arith.constant 0 : i32
    %c0_i32_0 = arith.constant 0 : i32
    %c0_i32_1 = arith.constant 0 : i32
    return %c0_i32, %c0_i32_0 : i32, i32
  }
  func.func @transform_8(%arg0: i32, %arg1: i32) -> (i32, i32, i32, i32) {
    %c0_i32 = arith.constant 0 : i32
    %c0_i32_0 = arith.constant 0 : i32
    %c0_i32_1 = arith.constant 0 : i32
    return %arg0, %arg1, %c0_i32, %c0_i32_0 : i32, i32, i32, i32
  }
}

</mosaic_0001>

<llo_original>
// kernel: tpu_custom_call.1
$region0: #{tpu_custom_call.1}
  #allocation0 [shape = 'u32[]', space=smem, size = 0x4, offset = 0x4, fixed_abs, tag = 'smem constant byte address 0x4 - core index']
  #allocation1 [shape = 'u32[72,128]{1,0:T(1,128)}', space=vmem, size = 0x9000, scoped, tag = 'internal scratch']
  #allocation2 [shape = 'f32[16,32]{1,0:T(8,128)}', space=vmem, size = 0x2000, scoped, tag = 'scratch operand']
  %s0 = inlined_call_operand.vmem [shape: f32[2,8,16,4], index: 0, kind: input, shape index: {}]
  %s1 = inlined_call_operand.vmem [shape: f32[2,16,32], index: 1, kind: input, shape index: {}]
  %s2 = inlined_call_operand.vmem [shape: f32[16,16], index: 2, kind: input, shape index: {}]
  %s3 = inlined_call_operand.vmem [shape: f32[16,16], index: 3, kind: input, shape index: {}]
  %s4 = inlined_call_operand.vmem [shape: f32[180,64], index: 4, kind: input, shape index: {}]
  %s5 = inlined_call_operand.vmem [shape: f32[180,32], index: 5, kind: input, shape index: {}]
  %s6 = inlined_call_operand.vmem [shape: f32[1,64], index: 6, kind: input, shape index: {}]
  %s7 = inlined_call_operand.vmem [shape: f32[1,32], index: 7, kind: input, shape index: {}]
  %s8 = inlined_call_operand.hbm [shape: f32[2,8,16,32], index: 8, kind: output, shape index: {}]
  %s9 = sld [smem:[#allocation0]]
  $region69: #{tpu_custom_call.1} parent=0
    _
  %s11 = ssub.s32 1, %s9
  %s12 = scalar_select 0, %s11, %s9
  $region1: #{tpu_custom_call.1} parent=0
    #allocation3 [shape = 'u8[16384]{0}', space=vmem, size = 0x4000, scoped, tag = 'output window, operand 0']
    #allocation4 [shape = 's32[2]{0}', space=sflag, size = 0x8, scoped, tag = 'scoped memory for tpu_custom_call.1']
    %13 = vsyncpa [#allocation4], 0
    %s14 = scalar_lea.sflag [#allocation4], 1
    %15 = vsyncpa %s14, 0
    loop: start=0, step=1, limit=18
    $region2: #{tpu_custom_call.1} parent=1 // loop_pre_header
      _
    $region3: #{tpu_custom_call.1} parent=1 // loop_header
      %s17 = sphi 0, %s21
      %p18 = scmp.ge.s32.totalorder %s17, 18
      %s24 = sphi 0, %s36
      %s25 = sphi 0, %s32
      %s26 = sphi 0, %s24
      %s27 = sphi 0, %s25
      %s28 = sphi 0, %s26
      %s29 = sphi 0, %s27
      %s41 = sphi 0, %s43
      %s44 = sphi 0, %s41
      %s45 = sphi 0, %s44
      %s61 = sphi 0, %s45
      %s67 = sphi 0, %s69
      %s70 = sphi 0, %s67
      %s71 = sphi 0, %s70
      %s87 = sphi 0, %s71
      %s91 = sphi 0, %s91
      %s93 = sphi 0, %s91
      %s94 = sphi 0, %s93
      %s108 = sphi 0, %s94
      %s112 = sphi 0, %s112
      %s114 = sphi 0, %s112
      %s115 = sphi 0, %s114
      %s129 = sphi 0, %s115
      %s133 = sphi 0, %s133
      %s135 = sphi 0, %s133
      %s136 = sphi 0, %s135
      %s150 = sphi 0, %s136
      %s154 = sphi 0, %s154
      %s156 = sphi 0, %s154
      %s157 = sphi 0, %s156
      %s171 = sphi 0, %s157
      %s175 = sphi 0, %s175
      %s177 = sphi 0, %s175
      %s178 = sphi 0, %s177
      %s192 = sphi 0, %s178
      %s196 = sphi 0, %s196
      %s198 = sphi 0, %s196
      %s199 = sphi 0, %s198
      %s213 = sphi 0, %s199
      %s221 = sphi 0, %s223
      %s224 = sphi 0, %s221
      %s225 = sphi 0, %s224
      %s241 = sphi 0, %s225
    $region4: #{tpu_custom_call.1} parent=1 // loop_header_branch
      %20 = sbr.rel (%p18) target = $region8
    $region5: #{tpu_custom_call.1} parent=1 // loop_body
      %s22 = ssub.s32 %s17, 1
      %s23 = ssub.s32 %s17, 2
      %s30 = sadd.s32 1, %s25
      %p31 = scmp.ge.s32.totalorder %s30, 8
      %s32 = scalar_select %p31, 0, %s30
      %s33 = sadd.s32 1, %s24
      %s34 = scalar_select %p31, %s33, %s24
      %p35 = scmp.ge.s32.totalorder %s34, 2
      %s36 = scalar_select %p35, 0, %s34
      %s37 = ssub.s32 %s24, %s36
      %s38 = ssub.s32 %s25, %s32
      %s39 = sor.u32 %s37, %s38
      %p40 = scmp.eq.s32.totalorder %s39, 0
      %s42 = sadd.s32 %s41, 1
      %s43 = scalar_select %p40, %s41, %s42
      %p46 = pneg %p40
      %p47 = scmp.eq.s32.totalorder %s17, 15
      %p48 = por %p46, %p47
      %p49 = scmp.ne.s32.totalorder %s41, %s44
      %p50 = scmp.eq.s32.totalorder %s17, 0
      %p51 = por %p49, %p50
      %p52 = scmp.ne.s32.totalorder %s41, %s44
      %p53 = scmp.eq.s32.totalorder %s22, 15
      %p54 = por %p52, %p53
      %p55 = scmp.ne.s32.totalorder %s44, %s45
      %p56 = scmp.eq.s32.totalorder %s22, 0
      %p57 = por %p55, %p56
      %p58 = scmp.ne.s32.totalorder %s44, %s45
      %p59 = scmp.eq.s32.totalorder %s23, 15
      %p60 = por %p58, %p59
      %p62 = scmp.ne.s32.totalorder %s45, %s61
      %p63 = scmp.eq.s32.totalorder %s23, 0
      %p64 = por %p62, %p63
      %s65 = ssub.s32 %s24, %s36
      %p66 = scmp.eq.s32.totalorder %s65, 0
      %s68 = sadd.s32 %s67, 1
      %s69 = scalar_select %p66, %s67, %s68
      %p72 = pneg %p66
      %p73 = scmp.eq.s32.totalorder %s17, 15
      %p74 = por %p72, %p73
      %p75 = scmp.ne.s32.totalorder %s67, %s70
      %p76 = scmp.eq.s32.totalorder %s17, 0
      %p77 = por %p75, %p76
      %p78 = scmp.ne.s32.totalorder %s67, %s70
      %p79 = scmp.eq.s32.totalorder %s22, 15
      %p80 = por %p78, %p79
      %p81 = scmp.ne.s32.totalorder %s70, %s71
      %p82 = scmp.eq.s32.totalorder %s22, 0
      %p83 = por %p81, %p82
      %p84 = scmp.ne.s32.totalorder %s70, %s71
      %p85 = scmp.eq.s32.totalorder %s23, 15
      %p86 = por %p84, %p85
      %p88 = scmp.ne.s32.totalorder %s71, %s87
      %p89 = scmp.eq.s32.totalorder %s23, 0
      %p90 = por %p88, %p89
      %s92 = sadd.s32 %s91, 1
      %p95 = scmp.eq.s32.totalorder %s17, 15
      %p96 = scmp.ne.s32.totalorder %s91, %s93
      %p97 = scmp.eq.s32.totalorder %s17, 0
      %p98 = por %p96, %p97
      %p99 = scmp.ne.s32.totalorder %s91, %s93
      %p100 = scmp.eq.s32.totalorder %s22, 15
      %p101 = por %p99, %p100
      %p102 = scmp.ne.s32.totalorder %s93, %s94
      %p103 = scmp.eq.s32.totalorder %s22, 0
      %p104 = por %p102, %p103
      %p105 = scmp.ne.s32.totalorder %s93, %s94
      %p106 = scmp.eq.s32.totalorder %s23, 15
      %p107 = por %p105, %p106
      %p109 = scmp.ne.s32.totalorder %s94, %s108
      %p110 = scmp.eq.s32.totalorder %s23, 0
      %p111 = por %p109, %p110
      %s113 = sadd.s32 %s112, 1
      %p116 = scmp.eq.s32.totalorder %s17, 15
      %p117 = scmp.ne.s32.totalorder %s112, %s114
      %p118 = scmp.eq.s32.totalorder %s17, 0
      %p119 = por %p117, %p118
      %p120 = scmp.ne.s32.totalorder %s112, %s114
      %p121 = scmp.eq.s32.totalorder %s22, 15
      %p122 = por %p120, %p121
      %p123 = scmp.ne.s32.totalorder %s114, %s115
      %p124 = scmp.eq.s32.totalorder %s22, 0
      %p125 = por %p123, %p124
      %p126 = scmp.ne.s32.totalorder %s114, %s115
      %p127 = scmp.eq.s32.totalorder %s23, 15
      %p128 = por %p126, %p127
      %p130 = scmp.ne.s32.totalorder %s115, %s129
      %p131 = scmp.eq.s32.totalorder %s23, 0
      %p132 = por %p130, %p131
      %s134 = sadd.s32 %s133, 1
      %p137 = scmp.eq.s32.totalorder %s17, 15
      %p138 = scmp.ne.s32.totalorder %s133, %s135
      %p139 = scmp.eq.s32.totalorder %s17, 0
      %p140 = por %p138, %p139
      %p141 = scmp.ne.s32.totalorder %s133, %s135
      %p142 = scmp.eq.s32.totalorder %s22, 15
      %p143 = por %p141, %p142
      %p144 = scmp.ne.s32.totalorder %s135, %s136
      %p145 = scmp.eq.s32.totalorder %s22, 0
      %p146 = por %p144, %p145
      %p147 = scmp.ne.s32.totalorder %s135, %s136
      %p148 = scmp.eq.s32.totalorder %s23, 15
      %p149 = por %p147, %p148
      %p151 = scmp.ne.s32.totalorder %s136, %s150
      %p152 = scmp.eq.s32.totalorder %s23, 0
      %p153 = por %p151, %p152
      %s155 = sadd.s32 %s154, 1
      %p158 = scmp.eq.s32.totalorder %s17, 15
      %p159 = scmp.ne.s32.totalorder %s154, %s156
      %p160 = scmp.eq.s32.totalorder %s17, 0
      %p161 = por %p159, %p160
      %p162 = scmp.ne.s32.totalorder %s154, %s156
      %p163 = scmp.eq.s32.totalorder %s22, 15
      %p164 = por %p162, %p163
      %p165 = scmp.ne.s32.totalorder %s156, %s157
      %p166 = scmp.eq.s32.totalorder %s22, 0
      %p167 = por %p165, %p166
      %p168 = scmp.ne.s32.totalorder %s156, %s157
      %p169 = scmp.eq.s32.totalorder %s23, 15
      %p170 = por %p168, %p169
      %p172 = scmp.ne.s32.totalorder %s157, %s171
      %p173 = scmp.eq.s32.totalorder %s23, 0
      %p174 = por %p172, %p173
      %s176 = sadd.s32 %s175, 1
      %p179 = scmp.eq.s32.totalorder %s17, 15
      %p180 = scmp.ne.s32.totalorder %s175, %s177
      %p181 = scmp.eq.s32.totalorder %s17, 0
      %p182 = por %p180, %p181
      %p183 = scmp.ne.s32.totalorder %s175, %s177
      %p184 = scmp.eq.s32.totalorder %s22, 15
      %p185 = por %p183, %p184
      %p186 = scmp.ne.s32.totalorder %s177, %s178
      %p187 = scmp.eq.s32.totalorder %s22, 0
      %p188 = por %p186, %p187
      %p189 = scmp.ne.s32.totalorder %s177, %s178
      %p190 = scmp.eq.s32.totalorder %s23, 15
      %p191 = por %p189, %p190
      %p193 = scmp.ne.s32.totalorder %s178, %s192
      %p194 = scmp.eq.s32.totalorder %s23, 0
      %p195 = por %p193, %p194
      %s197 = sadd.s32 %s196, 1
      %p200 = scmp.eq.s32.totalorder %s17, 15
      %p201 = scmp.ne.s32.totalorder %s196, %s198
      %p202 = scmp.eq.s32.totalorder %s17, 0
      %p203 = por %p201, %p202
      %p204 = scmp.ne.s32.totalorder %s196, %s198
      %p205 = scmp.eq.s32.totalorder %s22, 15
      %p206 = por %p204, %p205
      %p207 = scmp.ne.s32.totalorder %s198, %s199
      %p208 = scmp.eq.s32.totalorder %s22, 0
      %p209 = por %p207, %p208
      %p210 = scmp.ne.s32.totalorder %s198, %s199
      %p211 = scmp.eq.s32.totalorder %s23, 15
      %p212 = por %p210, %p211
      %p214 = scmp.ne.s32.totalorder %s199, %s213
      %p215 = scmp.eq.s32.totalorder %s23, 0
      %p216 = por %p214, %p215
      %s217 = ssub.s32 %s24, %s36
      %s218 = ssub.s32 %s25, %s32
      %s219 = sor.u32 %s217, %s218
      %p220 = scmp.eq.s32.totalorder %s219, 0
      %s222 = sadd.s32 %s221, 1
      %s223 = scalar_select %p220, %s221, %s222
      %p226 = pneg %p220
      %p227 = scmp.eq.s32.totalorder %s17, 15
      %p228 = por %p226, %p227
      %p229 = scmp.ne.s32.totalorder %s221, %s224
      %p230 = scmp.eq.s32.totalorder %s17, 0
      %p231 = por %p229, %p230
      %p232 = scmp.ne.s32.totalorder %s221, %s224
      %p233 = scmp.eq.s32.totalorder %s22, 15
      %p234 = por %p232, %p233
      %p235 = scmp.ne.s32.totalorder %s224, %s225
      %p236 = scmp.eq.s32.totalorder %s22, 0
      %p237 = por %p235, %p236
      %p238 = scmp.ne.s32.totalorder %s224, %s225
      %p239 = scmp.eq.s32.totalorder %s23, 15
      %p240 = por %p238, %p239
      %p242 = scmp.ne.s32.totalorder %s225, %s241
      %p243 = scmp.eq.s32.totalorder %s23, 0
      %p244 = por %p242, %p243
      %p245 = scmp.le.s32.totalorder 1, %s17
      %p246 = scmp.lt.s32.totalorder %s17, 17
      %p247 = pnand %p245, %p246
      %p248 = pneg %p247
      // Predicated region
      $region9: #{tpu_custom_call.1} parent=5 // pred_check
        _
      $region10: #{tpu_custom_call.1} parent=5 // pred_check_branch
        %250 = sbr.rel (%p247) target = $region12
      $region11: #{tpu_custom_call.1} parent=5 // pred_region
        %s251 = ssub.s32 %s17, 1
        // Predicated region
        $region13: #{tpu_custom_call.1} parent=11 // pred_check
          %p252 = pneg %p104
        $region14: #{tpu_custom_call.1} parent=11 // pred_check_branch
          %254 = sbr.rel (%p252) target = $region16
        $region15: #{tpu_custom_call.1} parent=11 // pred_region
          _
        $region16: #{tpu_custom_call.1} parent=11 // pred_fallthru
          _
        // Predicated region
        $region17: #{tpu_custom_call.1} parent=11 // pred_check
          %p255 = pneg %p125
        $region18: #{tpu_custom_call.1} parent=11 // pred_check_branch
          %257 = sbr.rel (%p255) target = $region20
        $region19: #{tpu_custom_call.1} parent=11 // pred_region
          _
        $region20: #{tpu_custom_call.1} parent=11 // pred_fallthru
          _
        // Predicated region
        $region21: #{tpu_custom_call.1} parent=11 // pred_check
          %p258 = pneg %p146
        $region22: #{tpu_custom_call.1} parent=11 // pred_check_branch
          %260 = sbr.rel (%p258) target = $region24
        $region23: #{tpu_custom_call.1} parent=11 // pred_region
          _
        $region24: #{tpu_custom_call.1} parent=11 // pred_fallthru
          _
        // Predicated region
        $region25: #{tpu_custom_call.1} parent=11 // pred_check
          %p261 = pneg %p167
        $region26: #{tpu_custom_call.1} parent=11 // pred_check_branch
          %263 = sbr.rel (%p261) target = $region28
        $region27: #{tpu_custom_call.1} parent=11 // pred_region
          _
        $region28: #{tpu_custom_call.1} parent=11 // pred_fallthru
          _
        // Predicated region
        $region29: #{tpu_custom_call.1} parent=11 // pred_check
          %p264 = pneg %p188
        $region30: #{tpu_custom_call.1} parent=11 // pred_check_branch
          %266 = sbr.rel (%p264) target = $region32
        $region31: #{tpu_custom_call.1} parent=11 // pred_region
          _
        $region32: #{tpu_custom_call.1} parent=11 // pred_fallthru
          _
        // Predicated region
        $region33: #{tpu_custom_call.1} parent=11 // pred_check
          %p267 = pneg %p209
        $region34: #{tpu_custom_call.1} parent=11 // pred_check_branch
          %269 = sbr.rel (%p267) target = $region36
        $region35: #{tpu_custom_call.1} parent=11 // pred_region
          _
        $region36: #{tpu_custom_call.1} parent=11 // pred_fallthru
          _
      $region12: #{tpu_custom_call.1} parent=5 // pred_fallthru
        _
      %p270 = scmp.lt.s32.totalorder %s17, 16
      // Predicated region
      $region37: #{tpu_custom_call.1} parent=5 // pred_check
        %p271 = pneg %p270
      $region38: #{tpu_custom_call.1} parent=5 // pred_check_branch
        %273 = sbr.rel (%p271) target = $region40
      $region39: #{tpu_custom_call.1} parent=5 // pred_region
        // Predicated region
        $region41: #{tpu_custom_call.1} parent=39 // pred_check
          %p274 = pneg %p51
        $region42: #{tpu_custom_call.1} parent=39 // pred_check_branch
          %276 = sbr.rel (%p274) target = $region44
        $region43: #{tpu_custom_call.1} parent=39 // pred_region
          %p277 = scmp.lt.s32.totalorder %s24, 1
          %s278 = scalar_select %p277, %s24, 1
          %p279 = scmp.lt.s32.totalorder %s25, 7
          %s280 = scalar_select %p279, %s25, 7
          %s281 = smul.addr %s280, 2
          %s282 = smul.addr %s278, 16
          %s283 = sadd.s32 %s281, %s282
          %s284 = smul.addr %s283, 8
          %s285 = scalar_lea.vmem %s0, %s284
        $region44: #{tpu_custom_call.1} parent=39 // pred_fallthru
          _
        // Predicated region
        $region45: #{tpu_custom_call.1} parent=39 // pred_check
          %p286 = pneg %p77
        $region46: #{tpu_custom_call.1} parent=39 // pred_check_branch
          %288 = sbr.rel (%p286) target = $region48
        $region47: #{tpu_custom_call.1} parent=39 // pred_region
          %p289 = scmp.lt.s32.totalorder %s24, 1
          %s290 = scalar_select %p289, %s24, 1
          %s291 = smul.addr %s290, 2
          %s292 = smul.addr %s291, 8
          %s293 = scalar_lea.vmem %s1, %s292
        $region48: #{tpu_custom_call.1} parent=39 // pred_fallthru
          _
      $region40: #{tpu_custom_call.1} parent=5 // pred_fallthru
        _
      %p294 = scmp.le.s32.totalorder 1, %s17
      %p295 = scmp.lt.s32.totalorder %s17, 17
      %p296 = pnand %p294, %p295
      %p297 = pneg %p296
      // Predicated region
      $region49: #{tpu_custom_call.1} parent=5 // pred_check
        _
      $region50: #{tpu_custom_call.1} parent=5 // pred_check_branch
        %299 = sbr.rel (%p296) target = $region52
      $region51: #{tpu_custom_call.1} parent=5 // pred_region
        %s300 = ssub.s32 %s17, 1
        %p301 = scmp.lt.s32.totalorder %s26, 1
        %s302 = scalar_select %p301, %s26, 1
        %p303 = scmp.lt.s32.totalorder %s27, 7
        %s304 = scalar_select %p303, %s27, 7
        %s305 = smul.addr %s304, 2
        %s306 = smul.addr %s302, 16
        %s307 = sadd.s32 %s305, %s306
        %s308 = smul.addr %s307, 8
        %s309 = scalar_lea.vmem %s0, %s308
        %p310 = pneg %p57
        %p311 = pneg %p54
        %p312 = scmp.lt.s32.totalorder %s26, 1
        %s313 = scalar_select %p312, %s26, 1
        %s314 = smul.addr %s313, 2
        %s315 = smul.addr %s314, 8
        %s316 = scalar_lea.vmem %s1, %s315
        %p317 = pneg %p83
        %p318 = pneg %p80
        %p319 = pneg %p104
        %p320 = pneg %p101
        %p321 = pneg %p125
        %p322 = pneg %p122
        %p323 = pneg %p146
        %p324 = pneg %p143
        %p325 = pneg %p167
        %p326 = pneg %p164
        %p327 = pneg %p188
        %p328 = pneg %p185
        %p329 = pneg %p209
        %p330 = pneg %p206
        %p331 = pneg %p237
        %p332 = pneg %p234
        %s333 = sand.u32 %s224, 1
        %s334 = scalar_lea.sflag [#allocation4], %s333
        %s335 = sand.u32 %s224, 1
        %s336 = smul.addr %s335, 16
        %s337 = scalar_lea.vmem [#allocation3], %s336
        %p338 = scmp.lt.s32.totalorder %s26, 1
        %s339 = scalar_select %p338, %s26, 1
        %p340 = scmp.lt.s32.totalorder %s27, 7
        %s341 = scalar_select %p340, %s27, 7
        %s342 = smul.addr %s341, 2
        %s343 = smul.addr %s339, 16
        %s344 = sadd.s32 %s342, %s343
        %s345 = smul.addr %s344, 8
        %s346 = scalar_lea.vmem %s0, %s345
        %p347 = scmp.lt.s32.totalorder %s26, 1
        %s348 = scalar_select %p347, %s26, 1
        %s349 = smul.addr %s348, 2
        %s350 = smul.addr %s349, 8
        %s351 = scalar_lea.vmem %s1, %s350
        %p352 = scmp.eq.s32.totalorder %s27, 0
        // Predicated region
        $region53: #{tpu_custom_call.1} parent=51 // pred_check
          %p353 = pneg %p352
        $region54: #{tpu_custom_call.1} parent=51 // pred_check_branch
          %355 = sbr.rel (%p353) target = $region56
        $region55: #{tpu_custom_call.1} parent=51 // pred_region
          %v356 = vld [vmem:[%s351] sm:$0xff]
          %v357 = vld [vmem:[%s351 + $0x8] sm:$0xff]
          %vm358 = vcmask 261120
          %359 = vst.msk [vmem:[#allocation2] sm:$0xff] %vm358, %v356
          %360 = vst.msk [vmem:[#allocation2 + $0x8] sm:$0xff] %vm358, %v357
        $region56: #{tpu_custom_call.1} parent=51 // pred_fallthru
          _
        %v361 = vld [vmem:[%s346] sm:$0xff]
        %v362 = vld [vmem:[%s346 + $0x8] sm:$0xff]
        %v363 = vld [vmem:[#allocation2] sm:$0xff]
        %v364 = vld [vmem:[#allocation2 + $0x8] sm:$0xff]
        %v365 = vld [vmem:[%s2] sm:$0xff]
        %v366 = vld [vmem:[%s2 + $0x8] sm:$0xff]
        %v367 = vld [vmem:[%s3] sm:$0xff]
        %v368 = vld [vmem:[%s3 + $0x8] sm:$0xff]
        %371 = vrot.lane.b32.xlu0 %v363, 4
        %v372 = vpop.permute.xlu0 %371
        %373 = vrot.lane.b32.xlu0 %v364, 4
        %v374 = vpop.permute.xlu0 %373
        %vm377 = vcmask 31744
        %v378 = vsel %vm377, %v361, %v372
        %v379 = vsel %vm377, %v362, %v374
        %vm380 = vcmask 130048
        %v382 = vsel %vm380, %v365, 0
        %v385 = vsel %vm380, %v366, 0
        %387 = vmatpush.msra.mxu0 0.0
        %388 = vmatpush.msra.mxu0 0.0
        %389 = vmatpush.msra.mxu0 0.0
        %390 = vmatpush.msra.mxu0 0.0
        %391 = vmatpush.msra.mxu0 0.0
        %392 = vmatpush.msra.mxu0 0.0
        %393 = vmatpush.msra.mxu0 0.0
        %394 = vmatpush.msra.mxu0 0.0
        %395 = vmatpush.msra.mxu0 0.0
        %396 = vmatpush.msra.mxu0 0.0
        %397 = vmatpush.msra.mxu0 0.0
        %398 = vmatpush.msra.mxu0 0.0
        %399 = vmatpush.msra.mxu0 0.0
        %400 = vmatpush.msra.mxu0 0.0
        %401 = vmatpush.msra.mxu0 %v379
        %402 = vmatpush.msra.mxu0 %v378
        %403 = vmatmul.f32.gmra.mxu0 %v382
        %v404 = vpop.f32.mrf.mxu0
        %v405 = vadd.f32 0.0, %v404
        %406 = vmatmul.f32.gmra.mxu0 %v385
        %v407 = vpop.f32.mrf.mxu0
        %v408 = vadd.f32 0.0, %v407
        %409 = vdwg.mxu0
        %410 = vmatpush.msra.mxu0 0.0
        %411 = vmatpush.msra.mxu0 0.0
        %412 = vmatpush.msra.mxu0 0.0
        %413 = vmatpush.msra.mxu0 0.0
        %414 = vmatpush.msra.mxu0 0.0
        %415 = vmatpush.msra.mxu0 0.0
        %416 = vmatpush.msra.mxu0 0.0
        %417 = vmatpush.msra.mxu0 0.0
        %418 = vmatpush.msra.mxu0 0.0
        %419 = vmatpush.msra.mxu0 0.0
        %420 = vmatpush.msra.mxu0 0.0
        %421 = vmatpush.msra.mxu0 0.0
        %422 = vmatpush.msra.mxu0 0.0
        %423 = vmatpush.msra.mxu0 0.0
        %424 = vmatpush.msra.mxu0 %v408
        %425 = vmatpush.msra.mxu0 %v405
        %426 = vmatmul.f32.gmra.mxu0 %v382
        %v427 = vpop.f32.mrf.mxu0
        %v428 = vadd.f32 0.0, %v427
        %429 = vmatmul.f32.gmra.mxu0 %v385
        %v430 = vpop.f32.mrf.mxu0
        %v431 = vadd.f32 0.0, %v430
        %432 = vdwg.mxu0
        %v433 = vmul.f32 %v428, 2.0
        %v434 = vmul.f32 %v431, 2.0
        %v435 = vsub.f32 %v433, %v378
        %v436 = vsub.f32 %v434, %v379
        %v438 = vsel %vm380, %v367, 0
        %v441 = vsel %vm380, %v368, 0
        %443 = vmatpush.msra.mxu0 0.0
        %444 = vmatpush.msra.mxu0 0.0
        %445 = vmatpush.msra.mxu0 0.0
        %446 = vmatpush.msra.mxu0 0.0
        %447 = vmatpush.msra.mxu0 0.0
        %448 = vmatpush.msra.mxu0 0.0
        %449 = vmatpush.msra.mxu0 0.0
        %450 = vmatpush.msra.mxu0 0.0
        %451 = vmatpush.msra.mxu0 0.0
        %452 = vmatpush.msra.mxu0 0.0
        %453 = vmatpush.msra.mxu0 0.0
        %454 = vmatpush.msra.mxu0 0.0
        %455 = vmatpush.msra.mxu0 0.0
        %456 = vmatpush.msra.mxu0 0.0
        %457 = vmatpush.msra.mxu0 %v379
        %458 = vmatpush.msra.mxu0 %v378
        %459 = vmatmul.f32.gmra.mxu0 %v438
        %v460 = vpop.f32.mrf.mxu0
        %v461 = vadd.f32 0.0, %v460
        %462 = vmatmul.f32.gmra.mxu0 %v441
        %v463 = vpop.f32.mrf.mxu0
        %v464 = vadd.f32 0.0, %v463
        %465 = vdwg.mxu0
        %466 = vmatpush.msra.mxu0 0.0
        %467 = vmatpush.msra.mxu0 0.0
        %468 = vmatpush.msra.mxu0 0.0
        %469 = vmatpush.msra.mxu0 0.0
        %470 = vmatpush.msra.mxu0 0.0
        %471 = vmatpush.msra.mxu0 0.0
        %472 = vmatpush.msra.mxu0 0.0
        %473 = vmatpush.msra.mxu0 0.0
        %474 = vmatpush.msra.mxu0 0.0
        %475 = vmatpush.msra.mxu0 0.0
        %476 = vmatpush.msra.mxu0 0.0
        %477 = vmatpush.msra.mxu0 0.0
        %478 = vmatpush.msra.mxu0 0.0
        %479 = vmatpush.msra.mxu0 0.0
        %480 = vmatpush.msra.mxu0 %v464
        %481 = vmatpush.msra.mxu0 %v461
        %482 = vmatmul.f32.gmra.mxu0 %v438
        %v483 = vpop.f32.mrf.mxu0
        %v484 = vadd.f32 0.0, %v483
        %485 = vmatmul.f32.gmra.mxu0 %v441
        %v486 = vpop.f32.mrf.mxu0
        %v487 = vadd.f32 0.0, %v486
        %488 = vdwg.mxu0
        %v489 = vmul.f32 %v484, 2.0
        %v490 = vmul.f32 %v487, 2.0
        %v491 = vsub.f32 %v489, %v378
        %v492 = vsub.f32 %v490, %v379
        %495 = vrot.lane.b32.xlu0 %v405, 36
        %v496 = vpop.permute.xlu0 %495
        %497 = vrot.lane.b32.xlu0 %v408, 36
        %v498 = vpop.permute.xlu0 %497
        %503 = vrot.lane.b32.xlu0 %v435, 72
        %v504 = vpop.permute.xlu0 %503
        %505 = vrot.lane.b32.xlu0 %v436, 72
        %v506 = vpop.permute.xlu0 %505
        %511 = vrot.lane.b32.xlu0 %v461, 108
        %v512 = vpop.permute.xlu0 %511
        %513 = vrot.lane.b32.xlu0 %v464, 108
        %v514 = vpop.permute.xlu0 %513
        %519 = vrot.lane.b32.xlu0 %v491, 16
        %v520 = vpop.permute.xlu0 %519
        %521 = vrot.lane.b32.xlu0 %v492, 16
        %v522 = vpop.permute.xlu0 %521
        %vm525 = vcmask 293888
        %v526 = vsel %vm525, %v378, %v496
        %v527 = vsel %vm525, %v379, %v498
        %vm528 = vcmask 588800
        %v529 = vsel %vm528, %v526, %v504
        %v530 = vsel %vm528, %v527, %v506
        %vm531 = vcmask 883712
        %v532 = vsel %vm531, %v529, %v512
        %v533 = vsel %vm531, %v530, %v514
        %v534 = vsel %vm380, %v512, %v520
        %v535 = vsel %vm380, %v514, %v522
        %v536 = vld [vmem:[%s4] sm:$0xff]
        %v537 = vld [vmem:[%s4 + $0x8] sm:$0xff]
        %v538 = vld [vmem:[%s4 + $0x10] sm:$0xff]
        %v539 = vld [vmem:[%s4 + $0x18] sm:$0xff]
        %v540 = vld [vmem:[%s4 + $0x20] sm:$0xff]
        %v541 = vld [vmem:[%s4 + $0x28] sm:$0xff]
        %v542 = vld [vmem:[%s4 + $0x30] sm:$0xff]
        %v543 = vld [vmem:[%s4 + $0x38] sm:$0xff]
        %v544 = vld [vmem:[%s4 + $0x40] sm:$0xff]
        %v545 = vld [vmem:[%s4 + $0x48] sm:$0xff]
        %v546 = vld [vmem:[%s4 + $0x50] sm:$0xff]
        %v547 = vld [vmem:[%s4 + $0x58] sm:$0xff]
        %v548 = vld [vmem:[%s4 + $0x60] sm:$0xff]
        %v549 = vld [vmem:[%s4 + $0x68] sm:$0xff]
        %v550 = vld [vmem:[%s4 + $0x70] sm:$0xff]
        %v551 = vld [vmem:[%s4 + $0x78] sm:$0xff]
        %v552 = vld [vmem:[%s4 + $0x80] sm:$0xff]
        %v553 = vld [vmem:[%s4 + $0x88] sm:$0xff]
        %v554 = vld [vmem:[%s4 + $0x90] sm:$0xff]
        %v555 = vld [vmem:[%s4 + $0x98] sm:$0xff]
        %v556 = vld [vmem:[%s4 + $0xa0] sm:$0xff]
        %v557 = vld [vmem:[%s4 + $0xa8] sm:$0xff]
        %v558 = vld [vmem:[%s4 + $0xb0] sm:$0xf]
        %v559 = vld [vmem:[%s6] sm:$0x1]
        %v561 = vperm.slane %v559, 0
        %vm563 = vcmask 424960
        %v565 = vsel %vm563, %v534, 0
        %v568 = vsel %vm563, %v535, 0
        %vm570 = vcmask 1043456
        %v572 = vsel %vm570, %v558, 0
        %574 = vmatpush.msra.mxu0 %v551
        %575 = vmatpush.msra.mxu0 %v550
        %576 = vmatpush.msra.mxu0 %v549
        %577 = vmatpush.msra.mxu0 %v548
        %578 = vmatpush.msra.mxu0 %v547
        %579 = vmatpush.msra.mxu0 %v546
        %580 = vmatpush.msra.mxu0 %v545
        %581 = vmatpush.msra.mxu0 %v544
        %582 = vmatpush.msra.mxu0 %v543
        %583 = vmatpush.msra.mxu0 %v542
        %584 = vmatpush.msra.mxu0 %v541
        %585 = vmatpush.msra.mxu0 %v540
        %586 = vmatpush.msra.mxu0 %v539
        %587 = vmatpush.msra.mxu0 %v538
        %588 = vmatpush.msra.mxu0 %v537
        %589 = vmatpush.msra.mxu0 %v536
        %590 = vmatmul.f32.gmra.mxu0 %v532
        %v591 = vpop.f32.mrf.mxu0
        %v592 = vadd.f32 %v561, %v591
        %593 = vmatmul.f32.gmra.mxu0 %v533
        %v594 = vpop.f32.mrf.mxu0
        %v595 = vadd.f32 %v561, %v594
        %596 = vdwg.mxu0
        %597 = vmatpush.msra.mxu0 0.0
        %598 = vmatpush.msra.mxu0 0.0
        %599 = vmatpush.msra.mxu0 0.0
        %600 = vmatpush.msra.mxu0 0.0
        %601 = vmatpush.msra.mxu0 0.0
        %602 = vmatpush.msra.mxu0 0.0
        %603 = vmatpush.msra.mxu0 0.0
        %604 = vmatpush.msra.mxu0 0.0
        %605 = vmatpush.msra.mxu0 0.0
        %606 = vmatpush.msra.mxu0 %v572
        %607 = vmatpush.msra.mxu0 %v557
        %608 = vmatpush.msra.mxu0 %v556
        %609 = vmatpush.msra.mxu0 %v555
        %610 = vmatpush.msra.mxu0 %v554
        %611 = vmatpush.msra.mxu0 %v553
        %612 = vmatpush.msra.mxu0 %v552
        %613 = vmatmul.f32.gmra.mxu0 %v565
        %v614 = vpop.f32.mrf.mxu0
        %v615 = vadd.f32 %v592, %v614
        %616 = vmatmul.f32.gmra.mxu0 %v568
        %v617 = vpop.f32.mrf.mxu0
        %v618 = vadd.f32 %v595, %v617
        %619 = vdwg.mxu0
        %v620 = vxor.u32 %v615, 2147483648
        %v621 = vxor.u32 %v618, 2147483648
        %v622 = vmul.f32 %v620, 1.442695
        %v623 = vpow.pop %v622
        %v624 = vmul.f32 %v621, 1.442695
        %v625 = vpow.pop %v624
        %v626 = vadd.f32 %v623, 1.0
        %v627 = vadd.f32 %v625, 1.0
        %v628 = vrcp.pop %v626
        %v629 = vmul.f32 %v626, %v628
        %v630 = vsub.f32 1.0, %v629
        %v631 = vmul.f32 %v628, %v630
        %v632 = vadd.f32 %v628, %v631
        %vm633 = vweird.f32 %v626
        %vm634 = vweird.f32 %v628
        %vm635 = vmor %vm633, %vm634
        %v636 = vsel %vm635, %v628, %v632
        %v637 = vand.u32 2147483647, %v626
        %vm638 = vcmp.eq.f32.partialorder %v637, 8.507059e+37
        %v639 = vand.u32 %v626, 2147483648
        %v640 = vor.u32 1.1754944e-38, %v639
        %v641 = vsel %vm638, %v640, %v636
        %v642 = vmul.f32 1.0, %v641
        %v643 = vrcp.pop %v627
        %v644 = vmul.f32 %v627, %v643
        %v645 = vsub.f32 1.0, %v644
        %v646 = vmul.f32 %v643, %v645
        %v647 = vadd.f32 %v643, %v646
        %vm648 = vweird.f32 %v627
        %vm649 = vweird.f32 %v643
        %vm650 = vmor %vm648, %vm649
        %v651 = vsel %vm650, %v643, %v647
        %v652 = vand.u32 2147483647, %v627
        %vm653 = vcmp.eq.f32.partialorder %v652, 8.507059e+37
        %v654 = vand.u32 %v627, 2147483648
        %v655 = vor.u32 1.1754944e-38, %v654
        %v656 = vsel %vm653, %v655, %v651
        %v657 = vmul.f32 1.0, %v656
        %v658 = vmul.f32 %v642, %v363
        %v659 = vmul.f32 %v657, %v364
        %662 = vrot.lane.b32.xlu0 %v658, 4
        %v663 = vpop.permute.xlu0 %662
        %664 = vrot.lane.b32.xlu0 %v659, 4
        %v665 = vpop.permute.xlu0 %664
        %v668 = vsel %vm377, %v361, %v663
        %v669 = vsel %vm377, %v362, %v665
        %670 = vmatpush.msra.mxu0 0.0
        %671 = vmatpush.msra.mxu0 0.0
        %672 = vmatpush.msra.mxu0 0.0
        %673 = vmatpush.msra.mxu0 0.0
        %674 = vmatpush.msra.mxu0 0.0
        %675 = vmatpush.msra.mxu0 0.0
        %676 = vmatpush.msra.mxu0 0.0
        %677 = vmatpush.msra.mxu0 0.0
        %678 = vmatpush.msra.mxu0 0.0
        %679 = vmatpush.msra.mxu0 0.0
        %680 = vmatpush.msra.mxu0 0.0
        %681 = vmatpush.msra.mxu0 0.0
        %682 = vmatpush.msra.mxu0 0.0
        %683 = vmatpush.msra.mxu0 0.0
        %684 = vmatpush.msra.mxu0 %v669
        %685 = vmatpush.msra.mxu0 %v668
        %686 = vmatmul.f32.gmra.mxu0 %v382
        %v687 = vpop.f32.mrf.mxu0
        %v688 = vadd.f32 0.0, %v687
        %689 = vmatmul.f32.gmra.mxu0 %v385
        %v690 = vpop.f32.mrf.mxu0
        %v691 = vadd.f32 0.0, %v690
        %692 = vdwg.mxu0
        %693 = vmatpush.msra.mxu0 0.0
        %694 = vmatpush.msra.mxu0 0.0
        %695 = vmatpush.msra.mxu0 0.0
        %696 = vmatpush.msra.mxu0 0.0
        %697 = vmatpush.msra.mxu0 0.0
        %698 = vmatpush.msra.mxu0 0.0
        %699 = vmatpush.msra.mxu0 0.0
        %700 = vmatpush.msra.mxu0 0.0
        %701 = vmatpush.msra.mxu0 0.0
        %702 = vmatpush.msra.mxu0 0.0
        %703 = vmatpush.msra.mxu0 0.0
        %704 = vmatpush.msra.mxu0 0.0
        %705 = vmatpush.msra.mxu0 0.0
        %706 = vmatpush.msra.mxu0 0.0
        %707 = vmatpush.msra.mxu0 %v691
        %708 = vmatpush.msra.mxu0 %v688
        %709 = vmatmul.f32.gmra.mxu0 %v382
        %v710 = vpop.f32.mrf.mxu0
        %v711 = vadd.f32 0.0, %v710
        %712 = vmatmul.f32.gmra.mxu0 %v385
        %v713 = vpop.f32.mrf.mxu0
        %v714 = vadd.f32 0.0, %v713
        %715 = vdwg.mxu0
        %v716 = vmul.f32 %v711, 2.0
        %v717 = vmul.f32 %v714, 2.0
        %v718 = vsub.f32 %v716, %v668
        %v719 = vsub.f32 %v717, %v669
        %720 = vmatpush.msra.mxu0 0.0
        %721 = vmatpush.msra.mxu0 0.0
        %722 = vmatpush.msra.mxu0 0.0
        %723 = vmatpush.msra.mxu0 0.0
        %724 = vmatpush.msra.mxu0 0.0
        %725 = vmatpush.msra.mxu0 0.0
        %726 = vmatpush.msra.mxu0 0.0
        %727 = vmatpush.msra.mxu0 0.0
        %728 = vmatpush.msra.mxu0 0.0
        %729 = vmatpush.msra.mxu0 0.0
        %730 = vmatpush.msra.mxu0 0.0
        %731 = vmatpush.msra.mxu0 0.0
        %732 = vmatpush.msra.mxu0 0.0
        %733 = vmatpush.msra.mxu0 0.0
        %734 = vmatpush.msra.mxu0 %v669
        %735 = vmatpush.msra.mxu0 %v668
        %736 = vmatmul.f32.gmra.mxu0 %v438
        %v737 = vpop.f32.mrf.mxu0
        %v738 = vadd.f32 0.0, %v737
        %739 = vmatmul.f32.gmra.mxu0 %v441
        %v740 = vpop.f32.mrf.mxu0
        %v741 = vadd.f32 0.0, %v740
        %742 = vdwg.mxu0
        %743 = vmatpush.msra.mxu0 0.0
        %744 = vmatpush.msra.mxu0 0.0
        %745 = vmatpush.msra.mxu0 0.0
        %746 = vmatpush.msra.mxu0 0.0
        %747 = vmatpush.msra.mxu0 0.0
        %748 = vmatpush.msra.mxu0 0.0
        %749 = vmatpush.msra.mxu0 0.0
        %750 = vmatpush.msra.mxu0 0.0
        %751 = vmatpush.msra.mxu0 0.0
        %752 = vmatpush.msra.mxu0 0.0
        %753 = vmatpush.msra.mxu0 0.0
        %754 = vmatpush.msra.mxu0 0.0
        %755 = vmatpush.msra.mxu0 0.0
        %756 = vmatpush.msra.mxu0 0.0
        %757 = vmatpush.msra.mxu0 %v741
        %758 = vmatpush.msra.mxu0 %v738
        %759 = vmatmul.f32.gmra.mxu0 %v438
        %v760 = vpop.f32.mrf.mxu0
        %v761 = vadd.f32 0.0, %v760
        %762 = vmatmul.f32.gmra.mxu0 %v441
        %v763 = vpop.f32.mrf.mxu0
        %v764 = vadd.f32 0.0, %v763
        %765 = vdwg.mxu0
        %v766 = vmul.f32 %v761, 2.0
        %v767 = vmul.f32 %v764, 2.0
        %v768 = vsub.f32 %v766, %v668
        %v769 = vsub.f32 %v767, %v669
        %772 = vrot.lane.b32.xlu0 %v688, 36
        %v773 = vpop.permute.xlu0 %772
        %774 = vrot.lane.b32.xlu0 %v691, 36
        %v775 = vpop.permute.xlu0 %774
        %780 = vrot.lane.b32.xlu0 %v718, 72
        %v781 = vpop.permute.xlu0 %780
        %782 = vrot.lane.b32.xlu0 %v719, 72
        %v783 = vpop.permute.xlu0 %782
        %788 = vrot.lane.b32.xlu0 %v738, 108
        %v789 = vpop.permute.xlu0 %788
        %790 = vrot.lane.b32.xlu0 %v741, 108
        %v791 = vpop.permute.xlu0 %790
        %796 = vrot.lane.b32.xlu0 %v768, 16
        %v797 = vpop.permute.xlu0 %796
        %798 = vrot.lane.b32.xlu0 %v769, 16
        %v799 = vpop.permute.xlu0 %798
        %v802 = vsel %vm525, %v668, %v773
        %v803 = vsel %vm525, %v669, %v775
        %v804 = vsel %vm528, %v802, %v781
        %v805 = vsel %vm528, %v803, %v783
        %v806 = vsel %vm531, %v804, %v789
        %v807 = vsel %vm531, %v805, %v791
        %v808 = vsel %vm380, %v789, %v797
        %v809 = vsel %vm380, %v791, %v799
        %v810 = vld [vmem:[%s5] sm:$0xff]
        %v811 = vld [vmem:[%s5 + $0x8] sm:$0xff]
        %v812 = vld [vmem:[%s5 + $0x10] sm:$0xff]
        %v813 = vld [vmem:[%s5 + $0x18] sm:$0xff]
        %v814 = vld [vmem:[%s5 + $0x20] sm:$0xff]
        %v815 = vld [vmem:[%s5 + $0x28] sm:$0xff]
        %v816 = vld [vmem:[%s5 + $0x30] sm:$0xff]
        %v817 = vld [vmem:[%s5 + $0x38] sm:$0xff]
        %v818 = vld [vmem:[%s5 + $0x40] sm:$0xff]
        %v819 = vld [vmem:[%s5 + $0x48] sm:$0xff]
        %v820 = vld [vmem:[%s5 + $0x50] sm:$0xff]
        %v821 = vld [vmem:[%s5 + $0x58] sm:$0xff]
        %v822 = vld [vmem:[%s5 + $0x60] sm:$0xff]
        %v823 = vld [vmem:[%s5 + $0x68] sm:$0xff]
        %v824 = vld [vmem:[%s5 + $0x70] sm:$0xff]
        %v825 = vld [vmem:[%s5 + $0x78] sm:$0xff]
        %v826 = vld [vmem:[%s5 + $0x80] sm:$0xff]
        %v827 = vld [vmem:[%s5 + $0x88] sm:$0xff]
        %v828 = vld [vmem:[%s5 + $0x90] sm:$0xff]
        %v829 = vld [vmem:[%s5 + $0x98] sm:$0xff]
        %v830 = vld [vmem:[%s5 + $0xa0] sm:$0xff]
        %v831 = vld [vmem:[%s5 + $0xa8] sm:$0xff]
        %v832 = vld [vmem:[%s5 + $0xb0] sm:$0xf]
        %v833 = vld [vmem:[%s7] sm:$0x1]
        %v835 = vperm.slane %v833, 0
        %v838 = vsel %vm563, %v808, 0
        %v841 = vsel %vm563, %v809, 0
        %v844 = vsel %vm570, %v832, 0
        %846 = vmatpush.msra.mxu0 %v825
        %847 = vmatpush.msra.mxu0 %v824
        %848 = vmatpush.msra.mxu0 %v823
        %849 = vmatpush.msra.mxu0 %v822
        %850 = vmatpush.msra.mxu0 %v821
        %851 = vmatpush.msra.mxu0 %v820
        %852 = vmatpush.msra.mxu0 %v819
        %853 = vmatpush.msra.mxu0 %v818
        %854 = vmatpush.msra.mxu0 %v817
        %855 = vmatpush.msra.mxu0 %v816
        %856 = vmatpush.msra.mxu0 %v815
        %857 = vmatpush.msra.mxu0 %v814
        %858 = vmatpush.msra.mxu0 %v813
        %859 = vmatpush.msra.mxu0 %v812
        %860 = vmatpush.msra.mxu0 %v811
        %861 = vmatpush.msra.mxu0 %v810
        %862 = vmatmul.f32.gmra.mxu0 %v806
        %v863 = vpop.f32.mrf.mxu0
        %v864 = vadd.f32 %v835, %v863
        %865 = vmatmul.f32.gmra.mxu0 %v807
        %v866 = vpop.f32.mrf.mxu0
        %v867 = vadd.f32 %v835, %v866
        %868 = vdwg.mxu0
        %869 = vmatpush.msra.mxu0 0.0
        %870 = vmatpush.msra.mxu0 0.0
        %871 = vmatpush.msra.mxu0 0.0
        %872 = vmatpush.msra.mxu0 0.0
        %873 = vmatpush.msra.mxu0 0.0
        %874 = vmatpush.msra.mxu0 0.0
        %875 = vmatpush.msra.mxu0 0.0
        %876 = vmatpush.msra.mxu0 0.0
        %877 = vmatpush.msra.mxu0 0.0
        %878 = vmatpush.msra.mxu0 %v844
        %879 = vmatpush.msra.mxu0 %v831
        %880 = vmatpush.msra.mxu0 %v830
        %881 = vmatpush.msra.mxu0 %v829
        %882 = vmatpush.msra.mxu0 %v828
        %883 = vmatpush.msra.mxu0 %v827
        %884 = vmatpush.msra.mxu0 %v826
        %885 = vmatmul.f32.gmra.mxu0 %v838
        %v886 = vpop.f32.mrf.mxu0
        %v887 = vadd.f32 %v864, %v886
        %888 = vmatmul.f32.gmra.mxu0 %v841
        %v889 = vpop.f32.mrf.mxu0
        %v890 = vadd.f32 %v867, %v889
        %891 = vdwg.mxu0
        %v892 = vtanh.pop %v887
        %v893 = vtanh.pop %v890
        %894 = vrot.lane.b32.xlu0 %v363, 32
        %v895 = vpop.permute.xlu0 %894
        %896 = vrot.lane.b32.xlu0 %v364, 32
        %v897 = vpop.permute.xlu0 %896
        %v900 = vmul.f32 %v642, %v895
        %v901 = vmul.f32 %v657, %v897
        %v902 = vsub.f32 1.0, %v642
        %v903 = vsub.f32 1.0, %v657
        %906 = vrot.lane.b32.xlu0 %v892, 32
        %v907 = vpop.permute.xlu0 %906
        %908 = vrot.lane.b32.xlu0 %v893, 32
        %v909 = vpop.permute.xlu0 %908
        %v912 = vmul.f32 %v902, %v907
        %v913 = vmul.f32 %v903, %v909
        %v914 = vadd.f32 %v900, %v912
        %v915 = vadd.f32 %v901, %v913
        %918 = vrot.lane.b32.xlu0 %v914, 96
        %v919 = vpop.permute.xlu0 %918
        %920 = vrot.lane.b32.xlu0 %v915, 96
        %v921 = vpop.permute.xlu0 %920
        %vm924 = vcmask 261120
        %925 = vst.msk [vmem:[#allocation2] sm:$0xff] %vm924, %v919
        %926 = vst.msk [vmem:[#allocation2 + $0x8] sm:$0xff] %vm924, %v921
        %927 = vst.msk [vmem:[%s337] sm:$0xff] %vm924, %v919
        %928 = vst.msk [vmem:[%s337 + $0x8] sm:$0xff] %vm924, %v921
        %s929 = sand.u32 %s224, 1
        %s930 = scalar_lea.sflag [#allocation4], %s929
        %s931 = sand.u32 %s224, 1
        %s932 = smul.addr %s931, 16
        %s933 = scalar_lea.vmem [#allocation3], %s932
        // Predicated region
        $region57: #{tpu_custom_call.1} parent=51 // pred_check
          %p934 = pneg %p234
        $region58: #{tpu_custom_call.1} parent=51 // pred_check_branch
          %936 = sbr.rel (%p934) target = $region60
        $region59: #{tpu_custom_call.1} parent=51 // pred_region
          %938 = vsyncadd %s930, 0
          %s939 = smul.addr %s27, 2
          %s940 = smul.addr %s26, 16
          %s941 = sadd.s32 %s939, %s940
          %s942 = smul.addr %s941, 8
          %s943 = scalar_lea.hbm %s8, %s942
          %s944 = sshll.u32 %s933, 4
          %s945 = int_to_ptr.vmem [resolvable:$true] %s944
          %s946 = sshll.u32 %s943, 4
          %s947 = int_to_ptr.hbm [resolvable:$true] %s946
          %952 = dma.vmem_to_hbm [thread:$0]  %s945, 256, %s947, %s930, 128, 128, 8
        $region60: #{tpu_custom_call.1} parent=51 // pred_fallthru
          _
      $region52: #{tpu_custom_call.1} parent=5 // pred_fallthru
        _
      %p953 = scmp.le.s32.totalorder 2, %s17
      // Predicated region
      $region61: #{tpu_custom_call.1} parent=5 // pred_check
        %p954 = pneg %p953
      $region62: #{tpu_custom_call.1} parent=5 // pred_check_branch
        %956 = sbr.rel (%p954) target = $region64
      $region63: #{tpu_custom_call.1} parent=5 // pred_region
        %s957 = ssub.s32 %s17, 2
        // Predicated region
        $region65: #{tpu_custom_call.1} parent=63 // pred_check
          %p958 = pneg %p240
        $region66: #{tpu_custom_call.1} parent=63 // pred_check_branch
          %960 = sbr.rel (%p958) target = $region68
        $region67: #{tpu_custom_call.1} parent=63 // pred_region
          %s961 = sand.u32 %s225, 1
          %s962 = scalar_lea.sflag [#allocation4], %s961
          %s963 = sand.u32 %s225, 1
          %s964 = smul.addr %s963, 16
          %s965 = scalar_lea.vmem [#allocation3], %s964
          %967 = dma.done %s962, 256
        $region68: #{tpu_custom_call.1} parent=63 // pred_fallthru
          _
      $region64: #{tpu_custom_call.1} parent=5 // pred_fallthru
        _
    $region6: #{tpu_custom_call.1} parent=1 // loop_footer
      %s21 = sadd.s32 1, %s17
    $region7: #{tpu_custom_call.1} parent=1 // loop_footer_branch
      %16 = sbr.rel target = $region3
    $region8: #{tpu_custom_call.1} parent=1 // loop_exit
      _
    %968 = vsyncpa [#allocation4], 1
    %s969 = scalar_lea.sflag [#allocation4], 1
    %970 = vsyncpa %s969, 1

</llo_original>
